<compile_context>
chip_gen: v6e
topology: v6e:2x2x1
jax: 0.10.0
libtpu: 0.0.40
codegen_flags: <defaults>
</compile_context>

<pallas_src>
import functools

import jax
import jax.numpy as jnp
from jax.experimental import pallas as pl
from jax.experimental.pallas import tpu as pltpu


def _local_rep_kernel(x_ref, w_ref, b_ref, o_ref, *, use_mxu):
    """tanh(x @ W' + b') for one batch tile.

    x_ref: (TILE_N, K)   w_ref: (K, M)   b_ref: (1, M)   o_ref: (TILE_N, M)
    """
    x = x_ref[...]
    w = w_ref[...]
    if use_mxu:
        z = jnp.dot(x, w, preferred_element_type=jnp.float32)
    else:
        # K is tiny: unrolled VPU broadcast-FMAs avoid the vmatmul push/pop
        # whose systolic pass would be almost entirely pipeline latency.
        k = x.shape[1]
        z = x[:, 0:1] * w[0:1, :]
        for kk in range(1, k):
            z = z + x[:, kk:kk + 1] * w[kk:kk + 1, :]
    z = z + b_ref[...]
    o_ref[...] = jnp.tanh(z).astype(o_ref.dtype)


def prepare_local_rep_params(weight, bias, x_max, x_min):
    """One-time fold of y = a*(x - x0) into the linear layer.

    weight: (M, K) in PyTorch nn.Linear layout;  bias: (M,)
    Returns (w_folded (K, M), b_folded (1, M)) such that
        tanh(a*(x - x0) @ weight.T + bias) == tanh(x @ w_folded + b_folded).
    Works with traced x_max/x_min as well as Python floats.
    """
    a = 2.0 / (x_max - x_min)
    x0 = (x_max + x_min) / 2.0
    w_folded = (a * weight).T                                         # (K, M)
    b_folded = (bias - a * x0 * weight.sum(axis=1)).reshape(1, -1)    # (1, M)
    return w_folded, b_folded


def local_rep_forward(x, w_folded, b_folded, *, tile_n=512):
    """x: (N, K) f32; w_folded: (K, M); b_folded: (1, M) -> (N, M) f32."""
    n, k = x.shape
    m = w_folded.shape[1]

    # Largest batch tile that respects the (8, ...) sublane constraint and the
    # requested cap; partial last block (if any) is handled by Pallas.
    tn = min(tile_n, ((n + 7) // 8) * 8)
    grid = (pl.cdiv(n, tn),)

    kernel = functools.partial(_local_rep_kernel, use_mxu=(k > 8))

    return pl.pallas_call(
        kernel,
        out_shape=jax.ShapeDtypeStruct((n, m), x.dtype),
        grid_spec=pltpu.PrefetchScalarGridSpec(
            num_scalar_prefetch=0,
            grid=grid,
            in_specs=[
                pl.BlockSpec((tn, k), lambda i: (i, 0)),   # batch tile of x
                pl.BlockSpec((k, m), lambda i: (0, 0)),    # weight: VMEM-resident
                pl.BlockSpec((1, m), lambda i: (0, 0)),    # bias:   VMEM-resident
            ],
            out_specs=pl.BlockSpec((tn, m), lambda i: (i, 0)),
        ),
        compiler_params=pltpu.CompilerParams(
            # Batch tiles are independent -> shard across both TCs on v7x.
            dimension_semantics=("parallel",),
        ),
    )(x, w_folded, b_folded)


def local_rep_reference(x, weight, bias, x_max, x_min):
    a = 2.0 / (x_max - x_min)
    x0 = (x_max + x_min) / 2.0
    y = a * (x - x0)
    return jnp.tanh(y @ weight.T + bias)


if __name__ == "__main__":
    # Small shapes consistent with the module: 1-D Helmholtz local rep,
    # in_features=2, hidden M=32, N=64 collocation points.  tile_n=16 so the
    # demo exercises a multi-step (pipelined) grid.
    in_features = 2
    M = 32
    N = 64
    x_max, x_min = 1.0, 0.0   # -> a = 2.0, x_0 = 0.5

    key = jax.random.PRNGKey(0)
    k_x, k_w, k_b = jax.random.split(key, 3)

    # nn.Linear default init: U(-1/sqrt(in), 1/sqrt(in))
    bound = 1.0 / (in_features ** 0.5)
    weight = jax.random.uniform(k_w, (M, in_features), jnp.float32, -bound, bound)
    bias = jax.random.uniform(k_b, (M,), jnp.float32, -bound, bound)
    x = jax.random.uniform(k_x, (N, in_features), jnp.float32, x_min, x_max)

    # One-time parameter prep (fold affine normalization into the layer).
    w_folded, b_folded = prepare_local_rep_params(weight, bias, x_max, x_min)

    out = local_rep_forward(x, w_folded, b_folded, tile_n=16)
    out = jax.block_until_ready(out)

    ref = local_rep_reference(x, weight, bias, x_max, x_min)
    assert out.shape == (N, M)
    assert jnp.allclose(out, ref, atol=1e-5, rtol=1e-5), "mismatch vs reference"

    print("KERNEL_OK")
</pallas_src>

<mosaic_0001>
module attributes {stable_mosaic.version = 11 : i64} {
  func.func @_local_rep_kernel(%arg0: i32, %arg1: memref<16x2xf32, #tpu.memory_space<vmem>>, %arg2: memref<2x32xf32, #tpu.memory_space<vmem>>, %arg3: memref<1x32xf32, #tpu.memory_space<vmem>>, %arg4: memref<16x32xf32, #tpu.memory_space<vmem>>) attributes {dimension_semantics = [#tpu.dimension_semantics<parallel>], iteration_bounds = array<i64: 4>, scalar_prefetch = 0 : i64, scratch_operands = 0 : i64, tpu.core_type = #tpu.core_type<tc>, window_params = [{transform_indices = @transform_0, window_bounds = array<i64: 16, 2>}, {pipeline_mode = #tpu.pipeline_mode<synchronous>, transform_indices = @transform_1, window_bounds = array<i64: 2, 32>}, {pipeline_mode = #tpu.pipeline_mode<synchronous>, transform_indices = @transform_2, window_bounds = array<i64: 1, 32>}, {transform_indices = @transform_3, window_bounds = array<i64: 16, 32>}]} {
    %c0 = arith.constant 0 : index
    %c0_0 = arith.constant 0 : index
    %0 = vector.load %arg1[%c0, %c0_0] : memref<16x2xf32, #tpu.memory_space<vmem>>, vector<16x2xf32>
    %c0_1 = arith.constant 0 : index
    %c0_2 = arith.constant 0 : index
    %1 = vector.load %arg2[%c0_1, %c0_2] : memref<2x32xf32, #tpu.memory_space<vmem>>, vector<2x32xf32>
    %2 = vector.extract_strided_slice %0 {offsets = [0, 0], sizes = [16, 1], strides = [1, 1]} : vector<16x2xf32> to vector<16x1xf32>
    %3 = vector.extract_strided_slice %1 {offsets = [0, 0], sizes = [1, 32], strides = [1, 1]} : vector<2x32xf32> to vector<1x32xf32>
    %4 = vector.broadcast %2 : vector<16x1xf32> to vector<16x32xf32>
    %5 = vector.broadcast %3 : vector<1x32xf32> to vector<16x32xf32>
    %6 = arith.mulf %4, %5 : vector<16x32xf32>
    %7 = vector.extract_strided_slice %0 {offsets = [0, 1], sizes = [16, 1], strides = [1, 1]} : vector<16x2xf32> to vector<16x1xf32>
    %8 = vector.extract_strided_slice %1 {offsets = [1, 0], sizes = [1, 32], strides = [1, 1]} : vector<2x32xf32> to vector<1x32xf32>
    %9 = vector.broadcast %7 : vector<16x1xf32> to vector<16x32xf32>
    %10 = vector.broadcast %8 : vector<1x32xf32> to vector<16x32xf32>
    %11 = arith.mulf %9, %10 : vector<16x32xf32>
    %12 = arith.addf %6, %11 : vector<16x32xf32>
    %c0_3 = arith.constant 0 : index
    %c0_4 = arith.constant 0 : index
    %13 = vector.load %arg3[%c0_3, %c0_4] : memref<1x32xf32, #tpu.memory_space<vmem>>, vector<1x32xf32>
    %14 = vector.broadcast %13 : vector<1x32xf32> to vector<16x32xf32>
    %15 = arith.addf %12, %14 : vector<16x32xf32>
    %16 = math.tanh %15 : vector<16x32xf32>
    %c0_5 = arith.constant 0 : index
    %c0_6 = arith.constant 0 : index
    %17 = vector.load %arg4[%c0_5, %c0_6] : memref<16x32xf32, #tpu.memory_space<vmem>>, vector<16x32xf32>
    tpu.vector_store %arg4[%c0_5, %c0_6], %16 {strides = array<i32>} : memref<16x32xf32, #tpu.memory_space<vmem>>, vector<16x32xf32>,
    return
  }
  func.func @transform_0(%arg0: i32) -> (i32, i32) {
    %c0_i32 = arith.constant 0 : i32
    %c0_i32_0 = arith.constant 0 : i32
    return %arg0, %c0_i32 : i32, i32
  }
  func.func @transform_1(%arg0: i32) -> (i32, i32) {
    %c0_i32 = arith.constant 0 : i32
    %c0_i32_0 = arith.constant 0 : i32
    %c0_i32_1 = arith.constant 0 : i32
    return %c0_i32, %c0_i32_0 : i32, i32
  }
  func.func @transform_2(%arg0: i32) -> (i32, i32) {
    %c0_i32 = arith.constant 0 : i32
    %c0_i32_0 = arith.constant 0 : i32
    %c0_i32_1 = arith.constant 0 : i32
    return %c0_i32, %c0_i32_0 : i32, i32
  }
  func.func @transform_3(%arg0: i32) -> (i32, i32) {
    %c0_i32 = arith.constant 0 : i32
    %c0_i32_0 = arith.constant 0 : i32
    return %arg0, %c0_i32 : i32, i32
  }
}

</mosaic_0001>

<llo_original>
// kernel: tpu_custom_call.1
$region0: #{tpu_custom_call.1}
  #allocation0 [shape = 'u32[]', space=smem, size = 0x4, offset = 0x4, fixed_abs, tag = 'smem constant byte address 0x4 - core index']
  #allocation1 [shape = 'u32[144,128]{1,0:T(1,128)}', space=vmem, size = 0x12000, scoped, tag = 'internal scratch']
  %s0 = inlined_call_operand.vmem [shape: f32[64,2], index: 0, kind: input, shape index: {}]
  %s1 = inlined_call_operand.vmem [shape: f32[2,32], index: 1, kind: input, shape index: {}]
  %s2 = inlined_call_operand.vmem [shape: f32[1,32], index: 2, kind: input, shape index: {}]
  %s3 = inlined_call_operand.vmem [shape: f32[64,32], index: 3, kind: output, shape index: {}]
  %s4 = sld [smem:[#allocation0]]
  $region45: #{tpu_custom_call.1} parent=0
    _
  %s6 = ssub.s32 1, %s4
  %s7 = scalar_select 0, %s6, %s4
  loop: start=0, step=1, limit=6
  $region2: #{tpu_custom_call.1} parent=0 // loop_pre_header
    _
  $region3: #{tpu_custom_call.1} parent=0 // loop_header
    %s9 = sphi 0, %s13
    %p10 = scmp.ge.s32.totalorder %s9, 6
    %s19 = sphi 0, %s21
    %s22 = sphi 0, %s19
    %s23 = sphi 0, %s22
    %s39 = sphi 0, %s23
    %s43 = sphi 0, %s43
    %s45 = sphi 0, %s43
    %s46 = sphi 0, %s45
    %s60 = sphi 0, %s46
    %s64 = sphi 0, %s64
    %s66 = sphi 0, %s64
    %s67 = sphi 0, %s66
    %s81 = sphi 0, %s67
    %s87 = sphi 0, %s89
    %s90 = sphi 0, %s87
    %s91 = sphi 0, %s90
    %s107 = sphi 0, %s91
  $region4: #{tpu_custom_call.1} parent=0 // loop_header_branch
    %12 = sbr.rel (%p10) target = $region8
  $region5: #{tpu_custom_call.1} parent=0 // loop_body
    %s14 = ssub.s32 %s9, 1
    %s15 = ssub.s32 %s9, 2
    %s16 = sadd.s32 %s9, 1
    %s17 = ssub.s32 %s9, %s16
    %p18 = scmp.eq.s32.totalorder %s17, 0
    %s20 = sadd.s32 %s19, 1
    %s21 = scalar_select %p18, %s19, %s20
    %p24 = pneg %p18
    %p25 = scmp.eq.s32.totalorder %s9, 3
    %p26 = por %p24, %p25
    %p27 = scmp.ne.s32.totalorder %s19, %s22
    %p28 = scmp.eq.s32.totalorder %s9, 0
    %p29 = por %p27, %p28
    %p30 = scmp.ne.s32.totalorder %s19, %s22
    %p31 = scmp.eq.s32.totalorder %s14, 3
    %p32 = por %p30, %p31
    %p33 = scmp.ne.s32.totalorder %s22, %s23
    %p34 = scmp.eq.s32.totalorder %s14, 0
    %p35 = por %p33, %p34
    %p36 = scmp.ne.s32.totalorder %s22, %s23
    %p37 = scmp.eq.s32.totalorder %s15, 3
    %p38 = por %p36, %p37
    %p40 = scmp.ne.s32.totalorder %s23, %s39
    %p41 = scmp.eq.s32.totalorder %s15, 0
    %p42 = por %p40, %p41
    %s44 = sadd.s32 %s43, 1
    %p47 = scmp.eq.s32.totalorder %s9, 3
    %p48 = scmp.ne.s32.totalorder %s43, %s45
    %p49 = scmp.eq.s32.totalorder %s9, 0
    %p50 = por %p48, %p49
    %p51 = scmp.ne.s32.totalorder %s43, %s45
    %p52 = scmp.eq.s32.totalorder %s14, 3
    %p53 = por %p51, %p52
    %p54 = scmp.ne.s32.totalorder %s45, %s46
    %p55 = scmp.eq.s32.totalorder %s14, 0
    %p56 = por %p54, %p55
    %p57 = scmp.ne.s32.totalorder %s45, %s46
    %p58 = scmp.eq.s32.totalorder %s15, 3
    %p59 = por %p57, %p58
    %p61 = scmp.ne.s32.totalorder %s46, %s60
    %p62 = scmp.eq.s32.totalorder %s15, 0
    %p63 = por %p61, %p62
    %s65 = sadd.s32 %s64, 1
    %p68 = scmp.eq.s32.totalorder %s9, 3
    %p69 = scmp.ne.s32.totalorder %s64, %s66
    %p70 = scmp.eq.s32.totalorder %s9, 0
    %p71 = por %p69, %p70
    %p72 = scmp.ne.s32.totalorder %s64, %s66
    %p73 = scmp.eq.s32.totalorder %s14, 3
    %p74 = por %p72, %p73
    %p75 = scmp.ne.s32.totalorder %s66, %s67
    %p76 = scmp.eq.s32.totalorder %s14, 0
    %p77 = por %p75, %p76
    %p78 = scmp.ne.s32.totalorder %s66, %s67
    %p79 = scmp.eq.s32.totalorder %s15, 3
    %p80 = por %p78, %p79
    %p82 = scmp.ne.s32.totalorder %s67, %s81
    %p83 = scmp.eq.s32.totalorder %s15, 0
    %p84 = por %p82, %p83
    %s85 = ssub.s32 %s9, %s16
    %p86 = scmp.eq.s32.totalorder %s85, 0
    %s88 = sadd.s32 %s87, 1
    %s89 = scalar_select %p86, %s87, %s88
    %p92 = pneg %p86
    %p93 = scmp.eq.s32.totalorder %s9, 3
    %p94 = por %p92, %p93
    %p95 = scmp.ne.s32.totalorder %s87, %s90
    %p96 = scmp.eq.s32.totalorder %s9, 0
    %p97 = por %p95, %p96
    %p98 = scmp.ne.s32.totalorder %s87, %s90
    %p99 = scmp.eq.s32.totalorder %s14, 3
    %p100 = por %p98, %p99
    %p101 = scmp.ne.s32.totalorder %s90, %s91
    %p102 = scmp.eq.s32.totalorder %s14, 0
    %p103 = por %p101, %p102
    %p104 = scmp.ne.s32.totalorder %s90, %s91
    %p105 = scmp.eq.s32.totalorder %s15, 3
    %p106 = por %p104, %p105
    %p108 = scmp.ne.s32.totalorder %s91, %s107
    %p109 = scmp.eq.s32.totalorder %s15, 0
    %p110 = por %p108, %p109
    %p111 = scmp.le.s32.totalorder 1, %s9
    %p112 = scmp.lt.s32.totalorder %s9, 5
    %p113 = pnand %p111, %p112
    %p114 = pneg %p113
    // Predicated region
    $region9: #{tpu_custom_call.1} parent=5 // pred_check
      _
    $region10: #{tpu_custom_call.1} parent=5 // pred_check_branch
      %116 = sbr.rel (%p113) target = $region12
    $region11: #{tpu_custom_call.1} parent=5 // pred_region
      %s117 = ssub.s32 %s9, 1
      // Predicated region
      $region13: #{tpu_custom_call.1} parent=11 // pred_check
        %p118 = pneg %p56
      $region14: #{tpu_custom_call.1} parent=11 // pred_check_branch
        %120 = sbr.rel (%p118) target = $region16
      $region15: #{tpu_custom_call.1} parent=11 // pred_region
        _
      $region16: #{tpu_custom_call.1} parent=11 // pred_fallthru
        _
      // Predicated region
      $region17: #{tpu_custom_call.1} parent=11 // pred_check
        %p121 = pneg %p77
      $region18: #{tpu_custom_call.1} parent=11 // pred_check_branch
        %123 = sbr.rel (%p121) target = $region20
      $region19: #{tpu_custom_call.1} parent=11 // pred_region
        _
      $region20: #{tpu_custom_call.1} parent=11 // pred_fallthru
        _
    $region12: #{tpu_custom_call.1} parent=5 // pred_fallthru
      _
    %p124 = scmp.lt.s32.totalorder %s9, 4
    // Predicated region
    $region21: #{tpu_custom_call.1} parent=5 // pred_check
      %p125 = pneg %p124
    $region22: #{tpu_custom_call.1} parent=5 // pred_check_branch
      %127 = sbr.rel (%p125) target = $region24
    $region23: #{tpu_custom_call.1} parent=5 // pred_region
      // Predicated region
      $region25: #{tpu_custom_call.1} parent=23 // pred_check
        %p128 = pneg %p29
      $region26: #{tpu_custom_call.1} parent=23 // pred_check_branch
        %130 = sbr.rel (%p128) target = $region28
      $region27: #{tpu_custom_call.1} parent=23 // pred_region
        %s131 = smul.u32 2, %s9
        %p132 = scmp.lt.s32.totalorder %s131, 7
        %s133 = scalar_select %p132, %s131, 7
        %s134 = smul.addr %s133, 8
        %s135 = scalar_lea.vmem %s0, %s134
        %s136 = smul.u32 2, %s9
      $region28: #{tpu_custom_call.1} parent=23 // pred_fallthru
        _
    $region24: #{tpu_custom_call.1} parent=5 // pred_fallthru
      _
    %p137 = scmp.le.s32.totalorder 1, %s9
    %p138 = scmp.lt.s32.totalorder %s9, 5
    %p139 = pnand %p137, %p138
    %p140 = pneg %p139
    // Predicated region
    $region29: #{tpu_custom_call.1} parent=5 // pred_check
      _
    $region30: #{tpu_custom_call.1} parent=5 // pred_check_branch
      %142 = sbr.rel (%p139) target = $region32
    $region31: #{tpu_custom_call.1} parent=5 // pred_region
      %s143 = ssub.s32 %s9, 1
      %s144 = smul.u32 2, %s14
      %p145 = scmp.lt.s32.totalorder %s144, 7
      %s146 = scalar_select %p145, %s144, 7
      %s147 = smul.addr %s146, 8
      %s148 = scalar_lea.vmem %s0, %s147
      %p149 = pneg %p35
      %p150 = pneg %p32
      %p151 = pneg %p56
      %p152 = pneg %p53
      %p153 = pneg %p77
      %p154 = pneg %p74
      %p155 = pneg %p103
      %p156 = pneg %p100
      %s157 = smul.u32 2, %s14
      %p158 = scmp.lt.s32.totalorder %s157, 7
      %s159 = scalar_select %p158, %s157, 7
      %s160 = smul.addr %s159, 8
      %s161 = scalar_lea.vmem %s3, %s160
      %s162 = smul.u32 2, %s14
      %p163 = scmp.lt.s32.totalorder %s162, 7
      %s164 = scalar_select %p163, %s162, 7
      %s165 = smul.addr %s164, 8
      %s166 = scalar_lea.vmem %s0, %s165
      %s167 = smul.u32 2, %s14
      %s168 = smul.u32 2, %s14
      %p169 = scmp.lt.s32.totalorder %s168, 7
      %s170 = scalar_select %p169, %s168, 7
      %s171 = smul.addr %s170, 8
      %s172 = scalar_lea.vmem %s3, %s171
      %s173 = smul.u32 2, %s14
      %v174 = vld [vmem:[%s166] sm:$0xff]
      %v175 = vld [vmem:[%s166 + $0x8] sm:$0xff]
      %v176 = vld [vmem:[%s1] sm:$0x3]
      %178 = vset.pattern.permute.xlu0 0
      %179 = vperm.xlu0 %178, %v174
      %v180 = vpop.permute.xlu0 %179
      %183 = vset.pattern.permute.xlu0 0
      %184 = vperm.xlu0 %183, %v175
      %v185 = vpop.permute.xlu0 %184
      %v187 = vlaneseq
      %v188 = vshrl.u32 %v187, 7
      %v189 = vsub.s32 0, %v188
      %v190 = vrot.slane %v176, %v189
      %v191 = vmul.f32 %v180, %v190
      %v192 = vmul.f32 %v185, %v190
      %193 = vset.pattern.permute.xlu0 1
      %194 = vperm.xlu0 %193, %v174
      %v195 = vpop.permute.xlu0 %194
      %197 = vset.pattern.permute.xlu0 1
      %198 = vperm.xlu0 %197, %v175
      %v199 = vpop.permute.xlu0 %198
      %v201 = vlaneseq
      %v202 = vshrl.u32 %v201, 7
      %v203 = vsub.s32 1, %v202
      %v204 = vrot.slane %v176, %v203
      %v205 = vmul.f32 %v195, %v204
      %v206 = vmul.f32 %v199, %v204
      %v207 = vadd.f32 %v191, %v205
      %v208 = vadd.f32 %v192, %v206
      %v209 = vld [vmem:[%s2] sm:$0x1]
      %v211 = vlaneseq
      %v212 = vshrl.u32 %v211, 7
      %v213 = vsub.s32 0, %v212
      %v214 = vrot.slane %v209, %v213
      %v216 = vadd.f32 %v207, %v214
      %v217 = vadd.f32 %v208, %v214
      %v218 = vtanh.pop %v216
      %v219 = vtanh.pop %v217
      %vm220 = vcmask 261120
      %221 = vst.msk [vmem:[%s172] sm:$0xff] %vm220, %v218
      %222 = vst.msk [vmem:[%s172 + $0x8] sm:$0xff] %vm220, %v219
      %s223 = smul.u32 2, %s14
      %p224 = scmp.lt.s32.totalorder %s223, 7
      %s225 = scalar_select %p224, %s223, 7
      %s226 = smul.addr %s225, 8
      %s227 = scalar_lea.vmem %s3, %s226
      // Predicated region
      $region33: #{tpu_custom_call.1} parent=31 // pred_check
        %p228 = pneg %p100
      $region34: #{tpu_custom_call.1} parent=31 // pred_check_branch
        %230 = sbr.rel (%p228) target = $region36
      $region35: #{tpu_custom_call.1} parent=31 // pred_region
        %s231 = smul.u32 2, %s14
      $region36: #{tpu_custom_call.1} parent=31 // pred_fallthru
        _
    $region32: #{tpu_custom_call.1} parent=5 // pred_fallthru
      _
    %p232 = scmp.le.s32.totalorder 2, %s9
    // Predicated region
    $region37: #{tpu_custom_call.1} parent=5 // pred_check
      %p233 = pneg %p232
    $region38: #{tpu_custom_call.1} parent=5 // pred_check_branch
      %235 = sbr.rel (%p233) target = $region40
    $region39: #{tpu_custom_call.1} parent=5 // pred_region
      %s236 = ssub.s32 %s9, 2
      // Predicated region
      $region41: #{tpu_custom_call.1} parent=39 // pred_check
        %p237 = pneg %p106
      $region42: #{tpu_custom_call.1} parent=39 // pred_check_branch
        %239 = sbr.rel (%p237) target = $region44
      $region43: #{tpu_custom_call.1} parent=39 // pred_region
        %s240 = smul.u32 2, %s15
        %p241 = scmp.lt.s32.totalorder %s240, 7
        %s242 = scalar_select %p241, %s240, 7
        %s243 = smul.addr %s242, 8
        %s244 = scalar_lea.vmem %s3, %s243
      $region44: #{tpu_custom_call.1} parent=39 // pred_fallthru
        _
    $region40: #{tpu_custom_call.1} parent=5 // pred_fallthru
      _
  $region6: #{tpu_custom_call.1} parent=0 // loop_footer
    %s13 = sadd.s32 1, %s9
  $region7: #{tpu_custom_call.1} parent=0 // loop_footer_branch
    %8 = sbr.rel target = $region3
  $region8: #{tpu_custom_call.1} parent=0 // loop_exit
    _

</llo_original>
